<compile_context>
chip_gen: v6e
topology: v6e:2x2x1
jax: 0.10.0
libtpu: 0.0.40
codegen_flags: <defaults>
</compile_context>

<pallas_src>
import functools

import jax
import jax.numpy as jnp
from jax.experimental import pallas as pl
from jax.experimental.pallas import tpu as pltpu


def _round_up(x: int, m: int) -> int:
    return (x + m - 1) // m * m


def wordavg_sum_kernel(g_ref, b_ref, o_ref):
    """g_ref: (O, B_pad, TILE_S)   b_ref: (O, 1)   o_ref: (O, TILE_S).

    The FC and the 1/B mean scale are already folded into the values in g_ref,
    so the batch-mean + Linear of the original module reduces to a plain sum
    over the (sublane) batch axis plus a broadcast bias add.  Pure streaming
    VPU/XLU work; output stores are lane-dense and unmasked.
    """
    o_ref[...] = jnp.sum(g_ref[...], axis=1) + b_ref[...]


@functools.partial(jax.jit, static_argnames=("tile_s",))
def word_avg_forward(text, emb_table, fc_w, fc_b, *, tile_s=1024):
    """Forward pass of WordAVGModel.

    text:      (S, B) int32 token indices (seq-major, as in the PyTorch module)
    emb_table: (V, E) f32 embedding table
    fc_w:      (E, O) f32   (transpose of PyTorch's (O, E) Linear weight)
    fc_b:      (O,)   f32
    returns:   (S, O) f32
    """
    S, B = text.shape
    V, E = emb_table.shape
    O = fc_w.shape[1]

    # --- (1) Fuse Linear + 1/B mean scale into the embedding table. ---------
    proj = jnp.dot(emb_table, fc_w * (1.0 / B),
                   preferred_element_type=jnp.float32)            # (V, O)

    # Tiny gather of the fused table (plain-JAX glue; (S, B, O) is ~E times
    # smaller than the original (S, B, E) embedded tensor).
    g = proj[text]                                                # (S, B, O)

    # --- (2) Lane-dense, TPU-friendly layout. -------------------------------
    # Put S on lanes (pad to a multiple of the tile), B on sublanes (pad to a
    # multiple of 8 with zeros; zeros are inert under the sum).
    tile_s = min(_round_up(tile_s, 128), _round_up(S, 128))
    S_pad = _round_up(S, tile_s)
    B_pad = _round_up(B, 8)

    gt = jnp.transpose(g, (2, 1, 0))                              # (O, B, S)
    gt = jnp.pad(gt, ((0, 0), (0, B_pad - B), (0, S_pad - S)))    # (O, B_pad, S_pad)

    bias2d = fc_b.reshape(O, 1).astype(jnp.float32)               # (O, 1)

    grid = (S_pad // tile_s,)

    out_t = pl.pallas_call(
        wordavg_sum_kernel,
        out_shape=jax.ShapeDtypeStruct((O, S_pad), jnp.float32),
        grid_spec=pltpu.PrefetchScalarGridSpec(
            num_scalar_prefetch=0,
            grid=grid,
            in_specs=[
                # Streamed fused-projection tiles: (O, B_pad, TILE_S), tiled
                # along the lane (S) axis -> double-buffered by Pallas.
                pl.BlockSpec((O, B_pad, tile_s), lambda i: (0, 0, i)),
                # Bias, resident across the grid.
                pl.BlockSpec((O, 1), lambda i: (0, 0)),
            ],
            out_specs=pl.BlockSpec((O, tile_s), lambda i: (0, i)),
        ),
        # --- (4) Shard the S grid axis across TensorCores on v7x. -----------
        compiler_params=pltpu.CompilerParams(
            dimension_semantics=("parallel",)),
    )(gt, bias2d)

    # Undo padding / transpose: (O, S_pad) -> (S, O).
    return out_t[:, :S].T


if __name__ == "__main__":
    # Small, deterministic synthetic setup consistent with the module.
    vocab_size = 64
    embedding_dim = 100          # matches the module definition
    output_dim = 1
    pad_idx = 1
    seq_len = 8
    batch = 2

    key = jax.random.PRNGKey(0)
    k_emb, k_w, k_b, k_txt = jax.random.split(key, 4)

    # nn.Embedding(vocab, emb, padding_idx=pad_idx): pad row initialized to 0.
    emb_table = jax.random.normal(k_emb, (vocab_size, embedding_dim),
                                  dtype=jnp.float32)
    emb_table = emb_table.at[pad_idx].set(0.0)

    # nn.Linear(emb, out): store weight transposed as (E, O).
    fc_w = (jax.random.normal(k_w, (output_dim, embedding_dim),
                              dtype=jnp.float32) * 0.1).T          # (E, O)
    fc_b = jax.random.normal(k_b, (output_dim,), dtype=jnp.float32) * 0.1

    text = jax.random.randint(k_txt, (seq_len, batch), 0, vocab_size,
                              dtype=jnp.int32)

    out = word_avg_forward(text, emb_table, fc_w, fc_b)
    out = jax.block_until_ready(out)

    # Reference in plain JAX, computed the *unfused* way (mean over batch,
    # then Linear) to validate the algebraic fusion end-to-end.
    ref = jnp.mean(emb_table[text], axis=1) @ fc_w + fc_b          # (S, O)
    assert out.shape == (seq_len, output_dim)
    assert jnp.allclose(out, ref, atol=1e-5, rtol=1e-5)

    print("KERNEL_OK")
</pallas_src>

<mosaic_0001>
module attributes {stable_mosaic.version = 11 : i64} {
  func.func @wordavg_sum_kernel(%arg0: i32, %arg1: memref<1x8x128xf32, #tpu.memory_space<vmem>>, %arg2: memref<1x1xf32, #tpu.memory_space<vmem>>, %arg3: memref<1x128xf32, #tpu.memory_space<vmem>>) attributes {dimension_semantics = [#tpu.dimension_semantics<parallel>], iteration_bounds = array<i64: 1>, scalar_prefetch = 0 : i64, scratch_operands = 0 : i64, tpu.core_type = #tpu.core_type<tc>, window_params = [{transform_indices = @transform_0, window_bounds = array<i64: 1, 8, 128>}, {pipeline_mode = #tpu.pipeline_mode<synchronous>, transform_indices = @transform_1, window_bounds = array<i64: 1, 1>}, {transform_indices = @transform_2, window_bounds = array<i64: 1, 128>}]} {
    %c0 = arith.constant 0 : index
    %c0_0 = arith.constant 0 : index
    %c0_1 = arith.constant 0 : index
    %0 = vector.load %arg1[%c0, %c0_0, %c0_1] : memref<1x8x128xf32, #tpu.memory_space<vmem>>, vector<1x8x128xf32>
    %cst = arith.constant dense<0.000000e+00> : vector<1x128xf32>
    %1 = vector.multi_reduction <add>, %0, %cst [1] : vector<1x8x128xf32> to vector<1x128xf32>
    %c0_2 = arith.constant 0 : index
    %c0_3 = arith.constant 0 : index
    %2 = vector.load %arg2[%c0_2, %c0_3] : memref<1x1xf32, #tpu.memory_space<vmem>>, vector<1x1xf32>
    %3 = vector.broadcast %2 : vector<1x1xf32> to vector<1x128xf32>
    %4 = arith.addf %1, %3 : vector<1x128xf32>
    %c0_4 = arith.constant 0 : index
    %c0_5 = arith.constant 0 : index
    %5 = vector.load %arg3[%c0_4, %c0_5] : memref<1x128xf32, #tpu.memory_space<vmem>>, vector<1x128xf32>
    tpu.vector_store %arg3[%c0_4, %c0_5], %4 {strides = array<i32>} : memref<1x128xf32, #tpu.memory_space<vmem>>, vector<1x128xf32>,
    return
  }
  func.func @transform_0(%arg0: i32) -> (i32, i32, i32) {
    %c0_i32 = arith.constant 0 : i32
    %c0_i32_0 = arith.constant 0 : i32
    %c0_i32_1 = arith.constant 0 : i32
    return %c0_i32, %c0_i32_0, %arg0 : i32, i32, i32
  }
  func.func @transform_1(%arg0: i32) -> (i32, i32) {
    %c0_i32 = arith.constant 0 : i32
    %c0_i32_0 = arith.constant 0 : i32
    %c0_i32_1 = arith.constant 0 : i32
    return %c0_i32, %c0_i32_0 : i32, i32
  }
  func.func @transform_2(%arg0: i32) -> (i32, i32) {
    %c0_i32 = arith.constant 0 : i32
    %c0_i32_0 = arith.constant 0 : i32
    return %c0_i32, %arg0 : i32, i32
  }
}

</mosaic_0001>

<llo_original>
// kernel: word_avg_forward.1
$region0: #{word_avg_forward.1}
  #allocation0 [shape = 'u32[]', space=smem, size = 0x4, offset = 0x4, fixed_abs, tag = 'smem constant byte address 0x4 - core index']
  #allocation1 [shape = 'u32[144,128]{1,0:T(1,128)}', space=vmem, size = 0x12000, scoped, tag = 'internal scratch']
  #allocation2 [shape = 'f32[1,1]{1,0:T(1,128)S(1)}', space=vmem, size = 0x200, scoped, tag = 'scoped memory for word_avg_forward.1']
  %s0 = inlined_call_operand.vmem [shape: f32[1,8,128], index: 0, kind: input, shape index: {}]
  %s1 = inlined_call_operand.<no memory space> [shape: f32[1,1], index: 1, kind: input, shape index: {}]
  %s2 = inlined_call_operand.vmem [shape: f32[1,128], index: 2, kind: output, shape index: {}]
  %s3 = sld [smem:[#allocation0]]
  $region18: #{word_avg_forward.1} parent=0
    _
  %s5 = ssub.s32 1, %s3
  %s6 = scalar_select 0, %s5, %s3
  %v7 = vstv %s1
  %8 = vst [vmem:[#allocation2] sm:$0x1] %v7
  // Predicated region
  $region2: #{word_avg_forward.1} parent=0 // pred_check
    _
  $region3: #{word_avg_forward.1} parent=0 // pred_check_branch
    %10 = sbr.rel (0) target = $region5
  $region4: #{word_avg_forward.1} parent=0 // pred_region
    _
  $region5: #{word_avg_forward.1} parent=0 // pred_fallthru
    _
  // Predicated region
  $region6: #{word_avg_forward.1} parent=0 // pred_check
    _
  $region7: #{word_avg_forward.1} parent=0 // pred_check_branch
    %12 = sbr.rel (0) target = $region9
  $region8: #{word_avg_forward.1} parent=0 // pred_region
    _
  $region9: #{word_avg_forward.1} parent=0 // pred_fallthru
    _
  %v13 = vld [vmem:[%s0] sm:$0xff]
  %v14 = vrot.slane %v13, 4
  %v15 = vadd.f32 %v13, %v14
  %v16 = vrot.slane %v15, 2
  %v17 = vadd.f32 %v15, %v16
  %v18 = vrot.slane %v17, 1
  %v19 = vadd.f32 %v17, %v18
  %v20 = vld [vmem:[#allocation2] sm:$0x1]
  %22 = vset.pattern.permute.xlu0 0
  %23 = vperm.xlu0 %22, %v20
  %v24 = vpop.permute.xlu0 %23
  %v26 = vlaneseq
  %v27 = vshrl.u32 %v26, 7
  %v28 = vsub.s32 0, %v27
  %v29 = vrot.slane %v24, %v28
  %v30 = vadd.f32 %v19, %v29
  %31 = vst [vmem:[%s2] sm:$0x1] %v30
  // Predicated region
  $region10: #{word_avg_forward.1} parent=0 // pred_check
    _
  $region11: #{word_avg_forward.1} parent=0 // pred_check_branch
    %33 = sbr.rel (0) target = $region13
  $region12: #{word_avg_forward.1} parent=0 // pred_region
    _
  $region13: #{word_avg_forward.1} parent=0 // pred_fallthru
    _
  // Predicated region
  $region14: #{word_avg_forward.1} parent=0 // pred_check
    _
  $region15: #{word_avg_forward.1} parent=0 // pred_check_branch
    %35 = sbr.rel (0) target = $region17
  $region16: #{word_avg_forward.1} parent=0 // pred_region
    _
  $region17: #{word_avg_forward.1} parent=0 // pred_fallthru
    _

</llo_original>
